<compile_context>
chip_gen: v7x
topology: tpu7x:2x2x1
jax: 0.10.0
libtpu: 0.0.40
codegen_flags: <defaults>
</compile_context>

<pallas_src>
import functools

import jax
import jax.numpy as jnp
from jax.experimental import pallas as pl
from jax.experimental.pallas import tpu as pltpu


def _kpt_loss_kernel(pred_ref, gt_ref, mask_ref, area_ref, inv_sig_ref,
                     out_ref, *, inv_n):
    """One lane-tile of the keypoint loss, accumulated into the SMEM scalar.

    pred_ref / gt_ref : (2, K, T) f32   plane 0 = x, plane 1 = y
    mask_ref          : (K, T) f32
    area_ref          : (1, T) f32
    inv_sig_ref       : (K, 1) f32      1 / (8 * sigma^2)
    out_ref           : (1, 1) f32 SMEM scalar accumulator (the final loss)
    """
    @pl.when(pl.program_id(0) == 0)
    def _():
        out_ref[0, 0] = jnp.float32(0.0)

    px = pred_ref[0]                                           # (K, T)
    py = pred_ref[1]
    gx = gt_ref[0]
    gy = gt_ref[1]
    mask = mask_ref[...]                                       # (K, T)
    inv_sig = inv_sig_ref[...]                                 # (K, 1)

    # squared euclidean distance per keypoint
    dx = px - gx
    dy = py - gy
    d = dx * dx + dy * dy                                      # (K, T)

    # e = d / (8*sigma^2 * (area + 1e-9)); the negate for exp(-e) is folded
    # into the (1, T) reciprocal so no (K, T) negate is needed.
    neg_inv_area = -pl.reciprocal(area_ref[...] + 1e-9)        # (1, T)
    e_neg = d * neg_inv_area * inv_sig                         # (K, T)
    masked_exp = jnp.exp(e_neg) * mask                         # (K, T) EUP+VPU

    # sum_k (1 - exp(-e)) * mask  ==  sum_k(mask) - sum_k(exp(-e) * mask)
    msum = jnp.sum(mask, axis=0, keepdims=True)                # (1, T)
    esum = jnp.sum(masked_exp, axis=0, keepdims=True)          # (1, T)
    # valid-keypoint count, exactly like torch.sum(kpt_mask != 0, dim=1)
    cnt = jnp.sum((mask != 0.0).astype(jnp.float32), axis=0, keepdims=True)

    # kpt_loss_factor * row_sum / (N*K)  ==  (msum - esum) / ((cnt + eps) * N)
    col = (msum - esum) * pl.reciprocal(cnt + 1e-9)            # (1, T)
    out_ref[0, 0] += jnp.sum(col) * inv_n


def keypoint_loss(pred_kpts, gt_kpts, kpt_mask, area, sigmas, *, tile_n=512):
    """Pallas implementation of ultralytics KeypointLoss.forward."""
    N, K = kpt_mask.shape
    f32 = jnp.float32

    # Lane-dense planar layouts: instance axis N last (lanes), K on sublanes.
    pred_t = jnp.transpose(pred_kpts.astype(f32), (2, 1, 0))   # (2, K, N)
    gt_t = jnp.transpose(gt_kpts.astype(f32), (2, 1, 0))       # (2, K, N)
    mask_t = jnp.transpose(kpt_mask.astype(f32), (1, 0))       # (K, N)
    area_t = jnp.reshape(area.astype(f32), (1, N))             # (1, N)
    # constant-folded sigma factor: 1 / ((2*sig)^2 * 2) = 1 / (8 * sig^2)
    inv_sig = (1.0 / (8.0 * sigmas.astype(f32) ** 2)).reshape(K, 1)

    if N <= tile_n:
        # single block covering the full (unpadded) lane axis
        tile, n_pad = N, N
    else:
        assert tile_n % 128 == 0, "lane tiles must be multiples of 128"
        tile = tile_n
        n_pad = ((N + tile - 1) // tile) * tile
        pad = n_pad - N
        if pad:
            # zero mask => padded columns contribute exactly 0 to the loss
            pred_t = jnp.pad(pred_t, ((0, 0), (0, 0), (0, pad)))
            gt_t = jnp.pad(gt_t, ((0, 0), (0, 0), (0, pad)))
            mask_t = jnp.pad(mask_t, ((0, 0), (0, pad)))
            area_t = jnp.pad(area_t, ((0, 0), (0, pad)), constant_values=1.0)
    grid = (n_pad // tile,)

    kernel = functools.partial(_kpt_loss_kernel, inv_n=1.0 / N)
    cost = pl.CostEstimate(
        flops=12 * n_pad * K,
        transcendentals=n_pad * K,
        bytes_accessed=4 * (5 * K * n_pad + n_pad + K + 1),
    )

    out = pl.pallas_call(
        kernel,
        out_shape=jax.ShapeDtypeStruct((1, 1), f32),
        grid=grid,
        in_specs=[
            pl.BlockSpec((2, K, tile), lambda i: (0, 0, i)),   # pred planes
            pl.BlockSpec((2, K, tile), lambda i: (0, 0, i)),   # gt planes
            pl.BlockSpec((K, tile), lambda i: (0, i)),         # mask
            pl.BlockSpec((1, tile), lambda i: (0, i)),         # area
            pl.BlockSpec((K, 1), lambda i: (0, 0)),            # 1/(8*sigma^2)
        ],
        out_specs=pl.BlockSpec((1, 1), lambda i: (0, 0),
                               memory_space=pltpu.MemorySpace.SMEM),
        compiler_params=pltpu.CompilerParams(
            dimension_semantics=("arbitrary",),                # on-chip accumulation
            vmem_limit_bytes=32 * 1024 * 1024,
        ),
        cost_estimate=cost,
    )(pred_t, gt_t, mask_t, area_t, inv_sig)
    return out[0, 0]


def keypoint_loss_ref(pred_kpts, gt_kpts, kpt_mask, area, sigmas):
    """Pure-JAX reference mirroring the PyTorch forward."""
    d = (pred_kpts[..., 0] - gt_kpts[..., 0]) ** 2 + \
        (pred_kpts[..., 1] - gt_kpts[..., 1]) ** 2
    klf = kpt_mask.shape[1] / (jnp.sum(kpt_mask != 0, axis=1) + 1e-9)
    e = d / ((2 * sigmas) ** 2 * (area + 1e-9) * 2)
    return jnp.mean(klf[:, None] * ((1 - jnp.exp(-e)) * kpt_mask))


if __name__ == "__main__":
    key = jax.random.PRNGKey(0)
    K = 17  # COCO keypoints
    sigmas = jnp.array(
        [0.026, 0.025, 0.025, 0.035, 0.035, 0.079, 0.079, 0.072, 0.072,
         0.062, 0.062, 0.107, 0.107, 0.087, 0.087, 0.089, 0.089],
        dtype=jnp.float32)

    def make_inputs(k, n):
        k1, k2, k3, k4 = jax.random.split(k, 4)
        pred = jax.random.normal(k1, (n, K, 2), dtype=jnp.float32) * 4.0
        gt = jax.random.normal(k2, (n, K, 2), dtype=jnp.float32) * 4.0
        mask = (jax.random.uniform(k3, (n, K)) > 0.3).astype(jnp.float32)
        ar = jax.random.uniform(k4, (n, 1), minval=10.0, maxval=100.0)
        return pred, gt, mask, ar

    loss_fn = jax.jit(keypoint_loss, static_argnames=("tile_n",))

    # Case 1: tiny N (single lane block, full-dim BlockSpecs).
    k1, k2 = jax.random.split(key)
    pred, gt, mask, ar = make_inputs(k1, 8)
    out = jax.block_until_ready(loss_fn(pred, gt, mask, ar, sigmas, tile_n=512))
    ref = keypoint_loss_ref(pred, gt, mask, ar, sigmas)
    assert jnp.allclose(out, ref, rtol=1e-5, atol=1e-6), (out, ref)

    # Case 2: N > tile -> 1-D grid over 128-wide lane tiles with zero padding.
    pred, gt, mask, ar = make_inputs(k2, 300)
    out = jax.block_until_ready(loss_fn(pred, gt, mask, ar, sigmas, tile_n=128))
    ref = keypoint_loss_ref(pred, gt, mask, ar, sigmas)
    assert jnp.allclose(out, ref, rtol=1e-5, atol=1e-6), (out, ref)

    print("KERNEL_OK")
</pallas_src>

<mosaic_0001>
module attributes {stable_mosaic.version = 11 : i64} {
  func.func @_kpt_loss_kernel(%arg0: i32, %arg1: memref<2x17x8xf32, #tpu.memory_space<vmem>>, %arg2: memref<2x17x8xf32, #tpu.memory_space<vmem>>, %arg3: memref<17x8xf32, #tpu.memory_space<vmem>>, %arg4: memref<1x8xf32, #tpu.memory_space<vmem>>, %arg5: memref<17x1xf32, #tpu.memory_space<vmem>>, %arg6: memref<1x1xf32, #tpu.memory_space<smem>>) attributes {dimension_semantics = [#tpu.dimension_semantics<arbitrary>], iteration_bounds = array<i64: 1>, scalar_prefetch = 0 : i64, scratch_operands = 0 : i64, tpu.core_type = #tpu.core_type<tc>, window_params = [{transform_indices = @transform_0, window_bounds = array<i64: 2, 17, 8>}, {transform_indices = @transform_1, window_bounds = array<i64: 2, 17, 8>}, {transform_indices = @transform_2, window_bounds = array<i64: 17, 8>}, {transform_indices = @transform_3, window_bounds = array<i64: 1, 8>}, {pipeline_mode = #tpu.pipeline_mode<synchronous>, transform_indices = @transform_4, window_bounds = array<i64: 17, 1>}, {transform_indices = @transform_5, window_bounds = array<i64: 1, 1>}]} {
    %c0_i32 = arith.constant 0 : i32
    %0 = arith.cmpi eq, %arg0, %c0_i32 : i32
    %1 = arith.extui %0 : i1 to i32
    %c0_i32_0 = arith.constant 0 : i32
    %2 = arith.cmpi ne, %1, %c0_i32_0 : i32
    scf.if %2 {
      %cst_29 = arith.constant 0.000000e+00 : f32
      %c0_30 = arith.constant 0 : index
      %c0_31 = arith.constant 0 : index
      %53 = memref.load %arg6[%c0_30, %c0_31] : memref<1x1xf32, #tpu.memory_space<smem>>
      memref.store %cst_29, %arg6[%c0_30, %c0_31] : memref<1x1xf32, #tpu.memory_space<smem>>
    } else {
    }
    %c0 = arith.constant 0 : index
    %c0_1 = arith.constant 0 : index
    %c0_2 = arith.constant 0 : index
    %3 = vector.load %arg1[%c0, %c0_1, %c0_2] : memref<2x17x8xf32, #tpu.memory_space<vmem>>, vector<1x17x8xf32>
    %4 = vector.shape_cast %3 : vector<1x17x8xf32> to vector<17x8xf32>
    %c1 = arith.constant 1 : index
    %c0_3 = arith.constant 0 : index
    %c0_4 = arith.constant 0 : index
    %5 = vector.load %arg1[%c1, %c0_3, %c0_4] : memref<2x17x8xf32, #tpu.memory_space<vmem>>, vector<1x17x8xf32>
    %6 = vector.shape_cast %5 : vector<1x17x8xf32> to vector<17x8xf32>
    %c0_5 = arith.constant 0 : index
    %c0_6 = arith.constant 0 : index
    %c0_7 = arith.constant 0 : index
    %7 = vector.load %arg2[%c0_5, %c0_6, %c0_7] : memref<2x17x8xf32, #tpu.memory_space<vmem>>, vector<1x17x8xf32>
    %8 = vector.shape_cast %7 : vector<1x17x8xf32> to vector<17x8xf32>
    %c1_8 = arith.constant 1 : index
    %c0_9 = arith.constant 0 : index
    %c0_10 = arith.constant 0 : index
    %9 = vector.load %arg2[%c1_8, %c0_9, %c0_10] : memref<2x17x8xf32, #tpu.memory_space<vmem>>, vector<1x17x8xf32>
    %10 = vector.shape_cast %9 : vector<1x17x8xf32> to vector<17x8xf32>
    %c0_11 = arith.constant 0 : index
    %c0_12 = arith.constant 0 : index
    %11 = vector.load %arg3[%c0_11, %c0_12] : memref<17x8xf32, #tpu.memory_space<vmem>>, vector<17x8xf32>
    %c0_13 = arith.constant 0 : index
    %c0_14 = arith.constant 0 : index
    %12 = vector.load %arg5[%c0_13, %c0_14] : memref<17x1xf32, #tpu.memory_space<vmem>>, vector<17x1xf32>
    %13 = arith.subf %4, %8 : vector<17x8xf32>
    %14 = arith.subf %6, %10 : vector<17x8xf32>
    %15 = arith.mulf %13, %13 : vector<17x8xf32>
    %16 = arith.mulf %14, %14 : vector<17x8xf32>
    %17 = arith.addf %15, %16 : vector<17x8xf32>
    %c0_15 = arith.constant 0 : index
    %c0_16 = arith.constant 0 : index
    %18 = vector.load %arg4[%c0_15, %c0_16] : memref<1x8xf32, #tpu.memory_space<vmem>>, vector<1x8xf32>
    %cst = arith.constant 9.99999971E-10 : f32
    %19 = vector.broadcast %cst : f32 to vector<1x8xf32>
    %20 = arith.addf %18, %19 : vector<1x8xf32>
    %21 = tpu.reciprocal %20 : vector<1x8xf32> -> vector<1x8xf32>
    %cst_17 = arith.constant 0.000000e+00 : f32
    %22 = vector.broadcast %cst_17 : f32 to vector<1x8xf32>
    %23 = arith.subf %22, %21 : vector<1x8xf32>
    %24 = vector.broadcast %23 : vector<1x8xf32> to vector<17x8xf32>
    %25 = arith.mulf %17, %24 : vector<17x8xf32>
    %26 = vector.broadcast %12 : vector<17x1xf32> to vector<17x8xf32>
    %27 = arith.mulf %25, %26 : vector<17x8xf32>
    %28 = math.exp %27 : vector<17x8xf32>
    %29 = arith.mulf %28, %11 : vector<17x8xf32>
    %cst_18 = arith.constant dense<0.000000e+00> : vector<8xf32>
    %30 = vector.multi_reduction <add>, %11, %cst_18 [0] : vector<17x8xf32> to vector<8xf32>
    %31 = vector.shape_cast %30 : vector<8xf32> to vector<1x8xf32>
    %cst_19 = arith.constant dense<0.000000e+00> : vector<8xf32>
    %32 = vector.multi_reduction <add>, %29, %cst_19 [0] : vector<17x8xf32> to vector<8xf32>
    %33 = vector.shape_cast %32 : vector<8xf32> to vector<1x8xf32>
    %cst_20 = arith.constant 0.000000e+00 : f32
    %34 = vector.broadcast %cst_20 : f32 to vector<17x8xf32>
    %35 = arith.cmpf one, %11, %34 : vector<17x8xf32>
    %36 = arith.extui %35 : vector<17x8xi1> to vector<17x8xi32>
    %37 = arith.sitofp %36 : vector<17x8xi32> to vector<17x8xf32>
    %cst_21 = arith.constant dense<0.000000e+00> : vector<8xf32>
    %38 = vector.multi_reduction <add>, %37, %cst_21 [0] : vector<17x8xf32> to vector<8xf32>
    %39 = vector.shape_cast %38 : vector<8xf32> to vector<1x8xf32>
    %40 = arith.subf %31, %33 : vector<1x8xf32>
    %cst_22 = arith.constant 9.99999971E-10 : f32
    %41 = vector.broadcast %cst_22 : f32 to vector<1x8xf32>
    %42 = arith.addf %39, %41 : vector<1x8xf32>
    %43 = tpu.reciprocal %42 : vector<1x8xf32> -> vector<1x8xf32>
    %44 = arith.mulf %40, %43 : vector<1x8xf32>
    %c0_23 = arith.constant 0 : index
    %c0_24 = arith.constant 0 : index
    %45 = memref.load %arg6[%c0_23, %c0_24] : memref<1x1xf32, #tpu.memory_space<smem>>
    %46 = vector.shape_cast %44 : vector<1x8xf32> to vector<1x1x8xf32>
    %cst_25 = arith.constant dense<0.000000e+00> : vector<1xf32>
    %47 = vector.multi_reduction <add>, %46, %cst_25 [1, 2] : vector<1x1x8xf32> to vector<1xf32>
    %48 = vector.shape_cast %47 : vector<1xf32> to vector<1x1x1xf32>
    %49 = vector.extract %48[0, 0, 0] : f32 from vector<1x1x1xf32>
    %cst_26 = arith.constant 1.250000e-01 : f32
    %50 = arith.mulf %49, %cst_26 : f32
    %51 = arith.addf %45, %50 : f32
    %c0_27 = arith.constant 0 : index
    %c0_28 = arith.constant 0 : index
    %52 = memref.load %arg6[%c0_27, %c0_28] : memref<1x1xf32, #tpu.memory_space<smem>>
    memref.store %51, %arg6[%c0_27, %c0_28] : memref<1x1xf32, #tpu.memory_space<smem>>
    return
  }
  func.func @transform_0(%arg0: i32) -> (i32, i32, i32) {
    %c0_i32 = arith.constant 0 : i32
    %c0_i32_0 = arith.constant 0 : i32
    %c0_i32_1 = arith.constant 0 : i32
    return %c0_i32, %c0_i32_0, %arg0 : i32, i32, i32
  }
  func.func @transform_1(%arg0: i32) -> (i32, i32, i32) {
    %c0_i32 = arith.constant 0 : i32
    %c0_i32_0 = arith.constant 0 : i32
    %c0_i32_1 = arith.constant 0 : i32
    return %c0_i32, %c0_i32_0, %arg0 : i32, i32, i32
  }
  func.func @transform_2(%arg0: i32) -> (i32, i32) {
    %c0_i32 = arith.constant 0 : i32
    %c0_i32_0 = arith.constant 0 : i32
    return %c0_i32, %arg0 : i32, i32
  }
  func.func @transform_3(%arg0: i32) -> (i32, i32) {
    %c0_i32 = arith.constant 0 : i32
    %c0_i32_0 = arith.constant 0 : i32
    return %c0_i32, %arg0 : i32, i32
  }
  func.func @transform_4(%arg0: i32) -> (i32, i32) {
    %c0_i32 = arith.constant 0 : i32
    %c0_i32_0 = arith.constant 0 : i32
    %c0_i32_1 = arith.constant 0 : i32
    return %c0_i32, %c0_i32_0 : i32, i32
  }
  func.func @transform_5(%arg0: i32) -> (i32, i32) {
    %c0_i32 = arith.constant 0 : i32
    %c0_i32_0 = arith.constant 0 : i32
    %c0_i32_1 = arith.constant 0 : i32
    return %c0_i32, %c0_i32_0 : i32, i32
  }
}

</mosaic_0001>

<llo_original>
// kernel: keypoint_loss.1
$region0: #{keypoint_loss.1}
  #allocation0 [shape = 'u32[]', space=smem, size = 0x4, offset = 0x4, fixed_abs, tag = 'smem constant byte address 0x4 - core index']
  #allocation1 [shape = 'u32[144,128]{1,0:T(1,128)}', space=vmem, size = 0x12000, scoped, tag = 'internal scratch']
  %s0 = inlined_call_operand.vmem [shape: f32[2,17,8], index: 0, kind: input, shape index: {}]
  %s1 = inlined_call_operand.vmem [shape: f32[2,17,8], index: 1, kind: input, shape index: {}]
  %s2 = inlined_call_operand.vmem [shape: f32[17,8], index: 2, kind: input, shape index: {}]
  %s3 = inlined_call_operand.vmem [shape: f32[1,8], index: 3, kind: input, shape index: {}]
  %s4 = inlined_call_operand.vmem [shape: f32[17,1], index: 4, kind: input, shape index: {}]
  %s5 = inlined_call_operand.hbm [shape: f32[1,1], index: 5, kind: output, shape index: {}]
  %s6 = sld [smem:[#allocation0]]
  $region34: #{keypoint_loss.1} parent=0
    _
  %s8 = ssub.s32 1, %s6
  %s9 = scalar_select 0, %s8, %s6
  $region1: #{keypoint_loss.1} parent=0
    #allocation2 [shape = 'u8[512]{0}', space=smem, size = 0x200, scoped, tag = 'output window, operand 0, single buffered']
    #allocation3 [shape = 's32[1]{0}', space=sflag, size = 0x4, scoped, tag = 'scoped memory for keypoint_loss.1']
    %10 = vsyncpa [#allocation3], 0
    // Predicated region
    $region2: #{keypoint_loss.1} parent=1 // pred_check
      _
    $region3: #{keypoint_loss.1} parent=1 // pred_check_branch
      %12 = sbr.rel (0) target = $region5
    $region4: #{keypoint_loss.1} parent=1 // pred_region
      _
    $region5: #{keypoint_loss.1} parent=1 // pred_fallthru
      _
    // Predicated region
    $region6: #{keypoint_loss.1} parent=1 // pred_check
      _
    $region7: #{keypoint_loss.1} parent=1 // pred_check_branch
      %14 = sbr.rel (0) target = $region9
    $region8: #{keypoint_loss.1} parent=1 // pred_region
      _
    $region9: #{keypoint_loss.1} parent=1 // pred_fallthru
      _
    // Predicated region
    $region10: #{keypoint_loss.1} parent=1 // pred_check
      _
    $region11: #{keypoint_loss.1} parent=1 // pred_check_branch
      %16 = sbr.rel (0) target = $region13
    $region12: #{keypoint_loss.1} parent=1 // pred_region
      _
    $region13: #{keypoint_loss.1} parent=1 // pred_fallthru
      _
    // Predicated region
    $region14: #{keypoint_loss.1} parent=1 // pred_check
      _
    $region15: #{keypoint_loss.1} parent=1 // pred_check_branch
      %18 = sbr.rel (0) target = $region17
    $region16: #{keypoint_loss.1} parent=1 // pred_region
      _
    $region17: #{keypoint_loss.1} parent=1 // pred_fallthru
      _
    // Predicated region
    $region18: #{keypoint_loss.1} parent=1 // pred_check
      _
    $region19: #{keypoint_loss.1} parent=1 // pred_check_branch
      %20 = sbr.rel (0) target = $region21
    $region20: #{keypoint_loss.1} parent=1 // pred_region
      _
    $region21: #{keypoint_loss.1} parent=1 // pred_fallthru
      _
    %p21 = scmp.eq.s32.totalorder 0, 0
    // Predicated region
    $region22: #{keypoint_loss.1} parent=1 // pred_check
      %p22 = pneg %p21
    $region23: #{keypoint_loss.1} parent=1 // pred_check_branch
      %24 = sbr.rel (%p22) target = $region25
    $region24: #{keypoint_loss.1} parent=1 // pred_region
      %s25 = scalar_lea.smem [#allocation2], 0
      %26 = sst [smem:[%s25]] 0.0
    $region25: #{keypoint_loss.1} parent=1 // pred_fallthru
      _
    %v27 = vld [vmem:[%s0] sm:$0xff]
    %v28 = vld [vmem:[%s0 + $0x8] sm:$0xff]
    %v29 = vld [vmem:[%s0 + $0x10] sm:$0x1]
    %s30 = scalar_lea.vmem %s0, 24
    %v31 = vld [vmem:[%s30] sm:$0xff]
    %v32 = vld [vmem:[%s30 + $0x8] sm:$0xff]
    %v33 = vld [vmem:[%s30 + $0x10] sm:$0x1]
    %v34 = vld [vmem:[%s1] sm:$0xff]
    %v35 = vld [vmem:[%s1 + $0x8] sm:$0xff]
    %v36 = vld [vmem:[%s1 + $0x10] sm:$0x1]
    %s37 = scalar_lea.vmem %s1, 24
    %v38 = vld [vmem:[%s37] sm:$0xff]
    %v39 = vld [vmem:[%s37 + $0x8] sm:$0xff]
    %v40 = vld [vmem:[%s37 + $0x10] sm:$0x1]
    %v41 = vld [vmem:[%s2] sm:$0xff]
    %v42 = vld [vmem:[%s2 + $0x8] sm:$0xff]
    %v43 = vld [vmem:[%s2 + $0x10] sm:$0x1]
    %v44 = vld [vmem:[%s4] sm:$0xff]
    %v45 = vld [vmem:[%s4 + $0x8] sm:$0xff]
    %v46 = vld [vmem:[%s4 + $0x10] sm:$0x1]
    %v47 = vsub.f32 %v27, %v34
    %v48 = vsub.f32 %v28, %v35
    %v49 = vsub.f32 %v29, %v36
    %v50 = vsub.f32 %v31, %v38
    %v51 = vsub.f32 %v32, %v39
    %v52 = vsub.f32 %v33, %v40
    %v53 = vmul.f32 %v47, %v47
    %v54 = vmul.f32 %v48, %v48
    %v55 = vmul.f32 %v49, %v49
    %v56 = vmul.f32 %v50, %v50
    %v57 = vmul.f32 %v51, %v51
    %v58 = vmul.f32 %v52, %v52
    %v59 = vadd.f32 %v53, %v56
    %v60 = vadd.f32 %v54, %v57
    %v61 = vadd.f32 %v55, %v58
    %v62 = vld [vmem:[%s3] sm:$0x1]
    %v63 = vadd.f32 %v62, 1e-09
    %v64 = vrcp.pop %v63
    %v65 = vsub.f32 0.0, %v64
    %v67 = vlaneseq
    %v68 = vshrl.u32 %v67, 7
    %v69 = vsub.s32 0, %v68
    %v70 = vrot.slane %v65, %v69
    %v72 = vmul.f32 %v59, %v70
    %v73 = vmul.f32 %v60, %v70
    %v74 = vmul.f32 %v61, %v70
    %76 = vset.pattern.permute.xlu0 0
    %77 = vperm.xlu0 %76, %v44
    %v78 = vpop.permute.xlu0 %77
    %81 = vset.pattern.permute.xlu0 0
    %82 = vperm.xlu0 %81, %v45
    %v83 = vpop.permute.xlu0 %82
    %86 = vset.pattern.permute.xlu0 0
    %87 = vperm.xlu0 %86, %v46
    %v88 = vpop.permute.xlu0 %87
    %v90 = vmul.f32 %v72, %v78
    %v91 = vmul.f32 %v73, %v83
    %v92 = vmul.f32 %v74, %v88
    %v93 = vmul.f32 %v90, 1.442695
    %v94 = vpow.pop %v93
    %v95 = vmul.f32 %v91, 1.442695
    %v96 = vpow.pop %v95
    %v97 = vmul.f32 %v92, 1.442695
    %v98 = vpow.pop %v97
    %v99 = vmul.f32 %v94, %v41
    %v100 = vmul.f32 %v96, %v42
    %v101 = vmul.f32 %v98, %v43
    %vm102 = vcmask 64512
    %v103 = vsel %vm102, %v41, 0.0
    %v104 = vsel %vm102, %v42, 0.0
    %v105 = vadd.f32 %v103, %v104
    %vm106 = vcmask 57344
    %v107 = vsel %vm106, %v43, 0.0
    %v108 = vadd.f32 %v105, %v107
    %v109 = vrot.slane %v108, 4
    %v110 = vadd.f32 %v108, %v109
    %v111 = vrot.slane %v110, 2
    %v112 = vadd.f32 %v110, %v111
    %v113 = vrot.slane %v112, 1
    %v114 = vadd.f32 %v112, %v113
    %v115 = vsel %vm102, %v99, 0.0
    %v116 = vsel %vm102, %v100, 0.0
    %v117 = vadd.f32 %v115, %v116
    %v118 = vsel %vm106, %v101, 0.0
    %v119 = vadd.f32 %v117, %v118
    %v120 = vrot.slane %v119, 4
    %v121 = vadd.f32 %v119, %v120
    %v122 = vrot.slane %v121, 2
    %v123 = vadd.f32 %v121, %v122
    %v124 = vrot.slane %v123, 1
    %v125 = vadd.f32 %v123, %v124
    %vm126 = vcmp.ne.f32.partialorder %v41, 0.0
    %vm127 = vcmp.ne.f32.partialorder %v42, 0.0
    %vm128 = vcmp.ne.f32.partialorder %v43, 0.0
    %v129 = vsel %vm126, 1, 0
    %v130 = vsel %vm127, 1, 0
    %v131 = vsel %vm128, 1, 0
    %v132 = vcvt.s32.f32 %v129
    %v133 = vcvt.s32.f32 %v130
    %v134 = vcvt.s32.f32 %v131
    %v135 = vsel %vm102, %v132, 0.0
    %v136 = vsel %vm102, %v133, 0.0
    %v137 = vadd.f32 %v135, %v136
    %v138 = vsel %vm106, %v134, 0.0
    %v139 = vadd.f32 %v137, %v138
    %v140 = vrot.slane %v139, 4
    %v141 = vadd.f32 %v139, %v140
    %v142 = vrot.slane %v141, 2
    %v143 = vadd.f32 %v141, %v142
    %v144 = vrot.slane %v143, 1
    %v145 = vadd.f32 %v143, %v144
    %v146 = vsub.f32 %v114, %v125
    %v147 = vadd.f32 %v145, 1e-09
    %v148 = vrcp.pop %v147
    %v149 = vmul.f32 %v146, %v148
    %s150 = sld [smem:[#allocation2]]
    %v151 = vsel %vm106, %v149, 0.0
    %152 = vadd.xlane.f32.xlu0 %v151
    %v153 = vpop.xlane.xlu0 %152
    %v154 = vrot.slane %v153, 4
    %v155 = vadd.f32 %v153, %v154
    %v156 = vrot.slane %v155, 2
    %v157 = vadd.f32 %v155, %v156
    %v158 = vrot.slane %v157, 1
    %v159 = vadd.f32 %v157, %v158
    %s160 = vtos %v159
    %s161 = smul.f32 %s160, 0.125
    %s162 = sadd.f32 %s150, %s161
    %s163 = scalar_lea.smem [#allocation2], 0
    %164 = sst [smem:[%s163]] %s162
    // Predicated region
    $region26: #{keypoint_loss.1} parent=1 // pred_check
      _
    $region27: #{keypoint_loss.1} parent=1 // pred_check_branch
      %166 = sbr.rel (0) target = $region29
    $region28: #{keypoint_loss.1} parent=1 // pred_region
      %s168 = ssub.s32 16, 16
      %169 = vsyncadd [#allocation3], %s168
      %172 = dma.smem_to_hbm [#allocation2], 16, %s5, [#allocation3]
    $region29: #{keypoint_loss.1} parent=1 // pred_fallthru
      _
    // Predicated region
    $region30: #{keypoint_loss.1} parent=1 // pred_check
      _
    $region31: #{keypoint_loss.1} parent=1 // pred_check_branch
      %174 = sbr.rel (0) target = $region33
    $region32: #{keypoint_loss.1} parent=1 // pred_region
      %175 = dma.done [#allocation3], 16
    $region33: #{keypoint_loss.1} parent=1 // pred_fallthru
      _
    %176 = sfence
    %177 = vsyncpa [#allocation3], 1

</llo_original>
